<compile_context>
chip_gen: v5e
topology: v5e:2x2
jax: 0.10.0
libtpu: 0.0.40
codegen_flags: <defaults>
</compile_context>

<pallas_src>
import functools

import jax
import jax.numpy as jnp
from jax.experimental import pallas as pl
from jax.experimental.pallas import tpu as pltpu

_SUBLANE = 8  # f32 sublane granularity


def _round_up(n, m):
    return ((n + m - 1) // m) * m


def dqn_kernel(x_ref, w1_ref, b1_ref, w2_ref, b2_ref, w3_ref, b3_ref, o_ref):
    """Fused 3-layer MLP (fc1 -> relu -> fc2 -> relu -> fc3) on one batch tile."""
    x = x_ref[...]

    h1 = jnp.dot(x, w1_ref[...], preferred_element_type=jnp.float32) + b1_ref[...]
    h1 = jnp.maximum(h1, 0.0)

    h2 = jnp.dot(h1, w2_ref[...], preferred_element_type=jnp.float32) + b2_ref[...]
    h2 = jnp.maximum(h2, 0.0)

    out = jnp.dot(h2, w3_ref[...], preferred_element_type=jnp.float32) + b3_ref[...]
    o_ref[...] = out.astype(o_ref.dtype)


def _dqn_pallas(x, params, block_batch):
    w1, b1, w2, b2, w3, b3 = params
    batch, state_size = x.shape
    action_size = w3.shape[1]

    # --- batch tiling -------------------------------------------------------
    rb = _round_up(batch, _SUBLANE)
    bm = min(block_batch, rb)
    # Cap the tile so large batches get >= 2 grid steps: the batch axis is
    # "parallel", so v7x shards steps across its 2 TensorCores (no-op on v5e/v6e).
    if rb >= 2 * _SUBLANE and bm > rb // 2:
        bm = rb // 2
    bm = _round_up(bm, _SUBLANE)

    # Last block may be partial: OOB input rows compute garbage that is never
    # written back (Pallas drops out-of-bounds output writes). No jnp.pad copies.
    grid = (pl.cdiv(batch, bm),)

    def resident(a):
        # Full-array block, constant index_map -> stays VMEM-resident across the grid.
        return pl.BlockSpec(a.shape, lambda i, _a=a: (0,) * _a.ndim)

    return pl.pallas_call(
        dqn_kernel,
        out_shape=jax.ShapeDtypeStruct((batch, action_size), jnp.float32),
        grid_spec=pl.GridSpec(
            grid=grid,
            in_specs=[
                pl.BlockSpec((bm, state_size), lambda i: (i, 0)),  # batch-tiled input
                resident(w1), resident(b1),
                resident(w2), resident(b2),
                resident(w3), resident(b3),
            ],
            out_specs=pl.BlockSpec((bm, action_size), lambda i: (i, 0)),
        ),
        compiler_params=pltpu.CompilerParams(
            dimension_semantics=("parallel",),
        ),
    )(x, w1, b1, w2, b2, w3, b3)


def _dqn_xla(x, params):
    w1, b1, w2, b2, w3, b3 = params
    h1 = jnp.maximum(x @ w1 + b1, 0.0)
    h2 = jnp.maximum(h1 @ w2 + b2, 0.0)
    return h2 @ w3 + b3


@functools.partial(jax.jit, static_argnames=("block_batch", "force_pallas"))
def dqn_forward(x, params, *, block_batch=1024, force_pallas=False):
    # Tiny acting-time batches are launch-overhead dominated: serve them with the
    # fused XLA chain; keep the Pallas kernel for the large (replay-buffer scoring /
    # training) batches where it wins.
    if x.shape[0] <= 32 and not force_pallas:
        return _dqn_xla(x, params)
    return _dqn_pallas(x, params, block_batch)


def init_dqn_params(key, state_size, action_size, hidden=24):
    """Deterministic init mimicking PyTorch nn.Linear (uniform +/- 1/sqrt(fan_in))."""
    keys = jax.random.split(key, 6)

    def linear(kw, kb, fan_in, fan_out):
        bound = 1.0 / jnp.sqrt(fan_in)
        w = jax.random.uniform(kw, (fan_in, fan_out), jnp.float32, -bound, bound)
        b = jax.random.uniform(kb, (1, fan_out), jnp.float32, -bound, bound)
        return w, b

    w1, b1 = linear(keys[0], keys[1], state_size, hidden)
    w2, b2 = linear(keys[2], keys[3], hidden, hidden)
    w3, b3 = linear(keys[4], keys[5], hidden, action_size)
    return (w1, b1, w2, b2, w3, b3)


def dqn_reference(x, params):
    w1, b1, w2, b2, w3, b3 = params
    h1 = jnp.maximum(x @ w1 + b1, 0.0)
    h2 = jnp.maximum(h1 @ w2 + b2, 0.0)
    return h2 @ w3 + b3


if __name__ == "__main__":
    key = jax.random.PRNGKey(0)
    k_x, k_p, k_x2 = jax.random.split(key, 3)

    batch = 2
    state_size = 8    # e.g. an 8-dim observation vector
    action_size = 4   # e.g. 4 discrete actions

    x = jax.random.normal(k_x, (batch, state_size), dtype=jnp.float32)
    params = init_dqn_params(k_p, state_size, action_size)

    # Small (acting-time) batch, forced through the Pallas kernel: single partial tile.
    out = dqn_forward(x, params, force_pallas=True)
    out = jax.block_until_ready(out)
    ref = dqn_reference(x, params)
    assert out.shape == (batch, action_size)
    assert jnp.allclose(out, ref, atol=1e-5, rtol=1e-5)

    # Larger (training-time) batch, not a multiple of the tile: exercises the
    # multi-step parallel grid and the partial last block (no wrapper pad/slice).
    big_batch = 1000
    x_big = jax.random.normal(k_x2, (big_batch, state_size), dtype=jnp.float32)
    out_big = dqn_forward(x_big, params, block_batch=256)
    out_big = jax.block_until_ready(out_big)
    ref_big = dqn_reference(x_big, params)
    assert out_big.shape == (big_batch, action_size)
    assert jnp.allclose(out_big, ref_big, atol=1e-5, rtol=1e-5)

    print("KERNEL_OK")
</pallas_src>

<mosaic_0001>
module attributes {stable_mosaic.version = 11 : i64} {
  func.func @dqn_kernel(%arg0: i32, %arg1: memref<8x8xf32, #tpu.memory_space<vmem>>, %arg2: memref<8x24xf32, #tpu.memory_space<vmem>>, %arg3: memref<1x24xf32, #tpu.memory_space<vmem>>, %arg4: memref<24x24xf32, #tpu.memory_space<vmem>>, %arg5: memref<1x24xf32, #tpu.memory_space<vmem>>, %arg6: memref<24x4xf32, #tpu.memory_space<vmem>>, %arg7: memref<1x4xf32, #tpu.memory_space<vmem>>, %arg8: memref<8x4xf32, #tpu.memory_space<vmem>>) attributes {dimension_semantics = [#tpu.dimension_semantics<parallel>], iteration_bounds = array<i64: 1>, scalar_prefetch = 0 : i64, scratch_operands = 0 : i64, tpu.core_type = #tpu.core_type<tc>, window_params = [{transform_indices = @transform_0, window_bounds = array<i64: 8, 8>}, {pipeline_mode = #tpu.pipeline_mode<synchronous>, transform_indices = @transform_1, window_bounds = array<i64: 8, 24>}, {pipeline_mode = #tpu.pipeline_mode<synchronous>, transform_indices = @transform_2, window_bounds = array<i64: 1, 24>}, {pipeline_mode = #tpu.pipeline_mode<synchronous>, transform_indices = @transform_3, window_bounds = array<i64: 24, 24>}, {pipeline_mode = #tpu.pipeline_mode<synchronous>, transform_indices = @transform_4, window_bounds = array<i64: 1, 24>}, {pipeline_mode = #tpu.pipeline_mode<synchronous>, transform_indices = @transform_5, window_bounds = array<i64: 24, 4>}, {pipeline_mode = #tpu.pipeline_mode<synchronous>, transform_indices = @transform_6, window_bounds = array<i64: 1, 4>}, {transform_indices = @transform_7, window_bounds = array<i64: 8, 4>}]} {
    %c0 = arith.constant 0 : index
    %c0_0 = arith.constant 0 : index
    %0 = vector.load %arg1[%c0, %c0_0] : memref<8x8xf32, #tpu.memory_space<vmem>>, vector<8x8xf32>
    %c0_1 = arith.constant 0 : index
    %c0_2 = arith.constant 0 : index
    %1 = vector.load %arg2[%c0_1, %c0_2] : memref<8x24xf32, #tpu.memory_space<vmem>>, vector<8x24xf32>
    %cst = arith.constant dense<0.000000e+00> : vector<8x24xf32>
    %2 = tpu.matmul %0, %1, %cst {dimension_numbers = #tpu.dot_dimension_numbers<[1], [0], [0], [1], [0, 0, 1, 1], [], []>} : vector<8x8xf32>, vector<8x24xf32>, vector<8x24xf32> -> vector<8x24xf32>
    %c0_3 = arith.constant 0 : index
    %c0_4 = arith.constant 0 : index
    %3 = vector.load %arg3[%c0_3, %c0_4] : memref<1x24xf32, #tpu.memory_space<vmem>>, vector<1x24xf32>
    %4 = vector.broadcast %3 : vector<1x24xf32> to vector<8x24xf32>
    %5 = arith.addf %2, %4 : vector<8x24xf32>
    %cst_5 = arith.constant 0.000000e+00 : f32
    %6 = vector.broadcast %cst_5 : f32 to vector<8x24xf32>
    %7 = arith.maximumf %5, %6 : vector<8x24xf32>
    %c0_6 = arith.constant 0 : index
    %c0_7 = arith.constant 0 : index
    %8 = vector.load %arg4[%c0_6, %c0_7] : memref<24x24xf32, #tpu.memory_space<vmem>>, vector<24x24xf32>
    %cst_8 = arith.constant dense<0.000000e+00> : vector<8x24xf32>
    %9 = tpu.matmul %7, %8, %cst_8 {dimension_numbers = #tpu.dot_dimension_numbers<[1], [0], [0], [1], [0, 0, 1, 1], [], []>} : vector<8x24xf32>, vector<24x24xf32>, vector<8x24xf32> -> vector<8x24xf32>
    %c0_9 = arith.constant 0 : index
    %c0_10 = arith.constant 0 : index
    %10 = vector.load %arg5[%c0_9, %c0_10] : memref<1x24xf32, #tpu.memory_space<vmem>>, vector<1x24xf32>
    %11 = vector.broadcast %10 : vector<1x24xf32> to vector<8x24xf32>
    %12 = arith.addf %9, %11 : vector<8x24xf32>
    %cst_11 = arith.constant 0.000000e+00 : f32
    %13 = vector.broadcast %cst_11 : f32 to vector<8x24xf32>
    %14 = arith.maximumf %12, %13 : vector<8x24xf32>
    %c0_12 = arith.constant 0 : index
    %c0_13 = arith.constant 0 : index
    %15 = vector.load %arg6[%c0_12, %c0_13] : memref<24x4xf32, #tpu.memory_space<vmem>>, vector<24x4xf32>
    %cst_14 = arith.constant dense<0.000000e+00> : vector<8x4xf32>
    %16 = tpu.matmul %14, %15, %cst_14 {dimension_numbers = #tpu.dot_dimension_numbers<[1], [0], [0], [1], [0, 0, 1, 1], [], []>} : vector<8x24xf32>, vector<24x4xf32>, vector<8x4xf32> -> vector<8x4xf32>
    %c0_15 = arith.constant 0 : index
    %c0_16 = arith.constant 0 : index
    %17 = vector.load %arg7[%c0_15, %c0_16] : memref<1x4xf32, #tpu.memory_space<vmem>>, vector<1x4xf32>
    %18 = vector.broadcast %17 : vector<1x4xf32> to vector<8x4xf32>
    %19 = arith.addf %16, %18 : vector<8x4xf32>
    %c0_17 = arith.constant 0 : index
    %c0_18 = arith.constant 0 : index
    %20 = vector.load %arg8[%c0_17, %c0_18] : memref<8x4xf32, #tpu.memory_space<vmem>>, vector<8x4xf32>
    tpu.vector_store %arg8[%c0_17, %c0_18], %19 {strides = array<i32>} : memref<8x4xf32, #tpu.memory_space<vmem>>, vector<8x4xf32>,
    return
  }
  func.func @transform_0(%arg0: i32) -> (i32, i32) {
    %c0_i32 = arith.constant 0 : i32
    %c0_i32_0 = arith.constant 0 : i32
    return %arg0, %c0_i32 : i32, i32
  }
  func.func @transform_1(%arg0: i32) -> (i32, i32) {
    %c0_i32 = arith.constant 0 : i32
    %c0_i32_0 = arith.constant 0 : i32
    %c0_i32_1 = arith.constant 0 : i32
    return %c0_i32, %c0_i32_0 : i32, i32
  }
  func.func @transform_2(%arg0: i32) -> (i32, i32) {
    %c0_i32 = arith.constant 0 : i32
    %c0_i32_0 = arith.constant 0 : i32
    %c0_i32_1 = arith.constant 0 : i32
    return %c0_i32, %c0_i32_0 : i32, i32
  }
  func.func @transform_3(%arg0: i32) -> (i32, i32) {
    %c0_i32 = arith.constant 0 : i32
    %c0_i32_0 = arith.constant 0 : i32
    %c0_i32_1 = arith.constant 0 : i32
    return %c0_i32, %c0_i32_0 : i32, i32
  }
  func.func @transform_4(%arg0: i32) -> (i32, i32) {
    %c0_i32 = arith.constant 0 : i32
    %c0_i32_0 = arith.constant 0 : i32
    %c0_i32_1 = arith.constant 0 : i32
    return %c0_i32, %c0_i32_0 : i32, i32
  }
  func.func @transform_5(%arg0: i32) -> (i32, i32) {
    %c0_i32 = arith.constant 0 : i32
    %c0_i32_0 = arith.constant 0 : i32
    %c0_i32_1 = arith.constant 0 : i32
    return %c0_i32, %c0_i32_0 : i32, i32
  }
  func.func @transform_6(%arg0: i32) -> (i32, i32) {
    %c0_i32 = arith.constant 0 : i32
    %c0_i32_0 = arith.constant 0 : i32
    %c0_i32_1 = arith.constant 0 : i32
    return %c0_i32, %c0_i32_0 : i32, i32
  }
  func.func @transform_7(%arg0: i32) -> (i32, i32) {
    %c0_i32 = arith.constant 0 : i32
    %c0_i32_0 = arith.constant 0 : i32
    return %arg0, %c0_i32 : i32, i32
  }
}

</mosaic_0001>

<llo_original>
// kernel: dqn_forward.1
$region0: #{dqn_forward.1}
  #allocation0 [shape = 'u32[]', space=smem, size = 0x4, offset = 0x4, fixed_abs, tag = 'smem constant byte address 0x4 - core index']
  #allocation1 [shape = 'u32[72,128]{1,0:T(1,128)}', space=vmem, size = 0x9000, scoped, tag = 'internal scratch']
  %s0 = inlined_call_operand.vmem [shape: f32[2,8], index: 0, kind: input, shape index: {}]
  %s1 = inlined_call_operand.hbm [shape: f32[8,24], index: 1, kind: input, shape index: {}]
  %s2 = inlined_call_operand.vmem [shape: f32[1,24], index: 2, kind: input, shape index: {}]
  %s3 = inlined_call_operand.vmem [shape: f32[24,24], index: 3, kind: input, shape index: {}]
  %s4 = inlined_call_operand.vmem [shape: f32[1,24], index: 4, kind: input, shape index: {}]
  %s5 = inlined_call_operand.vmem [shape: f32[24,4], index: 5, kind: input, shape index: {}]
  %s6 = inlined_call_operand.vmem [shape: f32[1,4], index: 6, kind: input, shape index: {}]
  %s7 = inlined_call_operand.hbm [shape: f32[2,4], index: 7, kind: output, shape index: {}]
  %s8 = sld [smem:[#allocation0]]
  $region42: #{dqn_forward.1} parent=0
    _
  %s10 = ssub.s32 1, %s8
  %s11 = scalar_select 0, %s10, %s8
  $region1: #{dqn_forward.1} parent=0
    #allocation2 [shape = 'u8[4096]{0}', space=vmem, size = 0x1000, scoped, tag = 'input window, operand 1, single buffered']
    #allocation3 [shape = 's32[1]{0}', space=sflag, size = 0x4, scoped, tag = 'scoped memory for dqn_forward.1']
    #allocation4 [shape = 's32[1]{0}', space=sflag, size = 0x4, scoped, tag = 'scoped memory for dqn_forward.1']
    #allocation5 [shape = 'u8[4096]{0}', space=vmem, size = 0x1000, scoped, tag = 'output window, operand 0, single buffered']
    %12 = vsyncpa [#allocation3], 0
    %13 = vsyncpa [#allocation4], 0
    // Predicated region
    $region2: #{dqn_forward.1} parent=1 // pred_check
      _
    $region3: #{dqn_forward.1} parent=1 // pred_check_branch
      %15 = sbr.rel (0) target = $region5
    $region4: #{dqn_forward.1} parent=1 // pred_region
      _
    $region5: #{dqn_forward.1} parent=1 // pred_fallthru
      _
    // Predicated region
    $region6: #{dqn_forward.1} parent=1 // pred_check
      _
    $region7: #{dqn_forward.1} parent=1 // pred_check_branch
      %17 = sbr.rel (0) target = $region9
    $region8: #{dqn_forward.1} parent=1 // pred_region
      %19 = vsyncadd [#allocation3], 0
      %s21 = sshll.u32 %s1, 4
      %s22 = int_to_ptr.hbm [resolvable:$true] %s21
      %s23 = sshll.u32 [#allocation2], 4
      %s24 = int_to_ptr.vmem [resolvable:$true] %s23
      %26 = dma.hbm_to_vmem [thread:$0]  %s22, 128, %s24, [#allocation3]
    $region9: #{dqn_forward.1} parent=1 // pred_fallthru
      _
    // Predicated region
    $region10: #{dqn_forward.1} parent=1 // pred_check
      _
    $region11: #{dqn_forward.1} parent=1 // pred_check_branch
      %28 = sbr.rel (0) target = $region13
    $region12: #{dqn_forward.1} parent=1 // pred_region
      _
    $region13: #{dqn_forward.1} parent=1 // pred_fallthru
      _
    // Predicated region
    $region14: #{dqn_forward.1} parent=1 // pred_check
      _
    $region15: #{dqn_forward.1} parent=1 // pred_check_branch
      %30 = sbr.rel (0) target = $region17
    $region16: #{dqn_forward.1} parent=1 // pred_region
      _
    $region17: #{dqn_forward.1} parent=1 // pred_fallthru
      _
    // Predicated region
    $region18: #{dqn_forward.1} parent=1 // pred_check
      _
    $region19: #{dqn_forward.1} parent=1 // pred_check_branch
      %32 = sbr.rel (0) target = $region21
    $region20: #{dqn_forward.1} parent=1 // pred_region
      _
    $region21: #{dqn_forward.1} parent=1 // pred_fallthru
      _
    // Predicated region
    $region22: #{dqn_forward.1} parent=1 // pred_check
      _
    $region23: #{dqn_forward.1} parent=1 // pred_check_branch
      %34 = sbr.rel (0) target = $region25
    $region24: #{dqn_forward.1} parent=1 // pred_region
      _
    $region25: #{dqn_forward.1} parent=1 // pred_fallthru
      _
    // Predicated region
    $region26: #{dqn_forward.1} parent=1 // pred_check
      _
    $region27: #{dqn_forward.1} parent=1 // pred_check_branch
      %36 = sbr.rel (0) target = $region29
    $region28: #{dqn_forward.1} parent=1 // pred_region
      _
    $region29: #{dqn_forward.1} parent=1 // pred_fallthru
      _
    // Predicated region
    $region30: #{dqn_forward.1} parent=1 // pred_check
      _
    $region31: #{dqn_forward.1} parent=1 // pred_check_branch
      %38 = sbr.rel (0) target = $region33
    $region32: #{dqn_forward.1} parent=1 // pred_region
      %40 = dma.done [#allocation3], 128
    $region33: #{dqn_forward.1} parent=1 // pred_fallthru
      _
    %v41 = vld [vmem:[%s0] sm:$0xff]
    %v42 = vld [vmem:[#allocation2] sm:$0xff]
    %v43 = vld [vmem:[%s2] sm:$0x1]
    %v45 = vperm.slane %v43, 0
    %vm47 = vcmask 64512
    %v49 = vsel %vm47, %v41, 0
    %51 = vmatpush.msra.mxu0 0.0
    %52 = vmatpush.msra.mxu0 0.0
    %53 = vmatpush.msra.mxu0 0.0
    %54 = vmatpush.msra.mxu0 0.0
    %55 = vmatpush.msra.mxu0 0.0
    %56 = vmatpush.msra.mxu0 0.0
    %57 = vmatpush.msra.mxu0 0.0
    %58 = vmatpush.msra.mxu0 0.0
    %59 = vmatpush.msra.mxu0 0.0
    %60 = vmatpush.msra.mxu0 0.0
    %61 = vmatpush.msra.mxu0 0.0
    %62 = vmatpush.msra.mxu0 0.0
    %63 = vmatpush.msra.mxu0 0.0
    %64 = vmatpush.msra.mxu0 0.0
    %65 = vmatpush.msra.mxu0 0.0
    %66 = vmatpush.msra.mxu0 %v42
    %67 = vmatmul.f32.gmra.mxu0 %v49
    %v68 = vpop.f32.mrf.mxu0
    %v69 = vadd.f32 %v45, %v68
    %70 = vdwg.mxu0
    %v71 = vmax.f32 %v69, 0.0
    %v72 = vld [vmem:[%s3] sm:$0xff]
    %v73 = vld [vmem:[%s3 + $0x8] sm:$0xff]
    %v74 = vld [vmem:[%s3 + $0x10] sm:$0xff]
    %v75 = vld [vmem:[%s4] sm:$0x1]
    %v77 = vperm.slane %v75, 0
    %vm79 = vcmask 195584
    %v81 = vsel %vm79, %v71, 0
    %83 = vmatpush.msra.mxu0 0.0
    %84 = vmatpush.msra.mxu0 0.0
    %85 = vmatpush.msra.mxu0 0.0
    %86 = vmatpush.msra.mxu0 0.0
    %87 = vmatpush.msra.mxu0 0.0
    %88 = vmatpush.msra.mxu0 0.0
    %89 = vmatpush.msra.mxu0 0.0
    %90 = vmatpush.msra.mxu0 0.0
    %91 = vmatpush.msra.mxu0 0.0
    %92 = vmatpush.msra.mxu0 0.0
    %93 = vmatpush.msra.mxu0 0.0
    %94 = vmatpush.msra.mxu0 0.0
    %95 = vmatpush.msra.mxu0 0.0
    %96 = vmatpush.msra.mxu0 %v74
    %97 = vmatpush.msra.mxu0 %v73
    %98 = vmatpush.msra.mxu0 %v72
    %99 = vmatmul.f32.gmra.mxu0 %v81
    %v100 = vpop.f32.mrf.mxu0
    %v101 = vadd.f32 %v77, %v100
    %102 = vdwg.mxu0
    %v103 = vmax.f32 %v101, 0.0
    %v104 = vld [vmem:[%s5] sm:$0xff]
    %v105 = vld [vmem:[%s5 + $0x8] sm:$0xff]
    %v106 = vld [vmem:[%s5 + $0x10] sm:$0xff]
    %v107 = vld [vmem:[%s6] sm:$0x1]
    %v109 = vperm.slane %v107, 0
    %v112 = vsel %vm79, %v103, 0
    %114 = vmatpush.msra.mxu0 0.0
    %115 = vmatpush.msra.mxu0 0.0
    %116 = vmatpush.msra.mxu0 0.0
    %117 = vmatpush.msra.mxu0 0.0
    %118 = vmatpush.msra.mxu0 0.0
    %119 = vmatpush.msra.mxu0 0.0
    %120 = vmatpush.msra.mxu0 0.0
    %121 = vmatpush.msra.mxu0 0.0
    %122 = vmatpush.msra.mxu0 0.0
    %123 = vmatpush.msra.mxu0 0.0
    %124 = vmatpush.msra.mxu0 0.0
    %125 = vmatpush.msra.mxu0 0.0
    %126 = vmatpush.msra.mxu0 0.0
    %127 = vmatpush.msra.mxu0 %v106
    %128 = vmatpush.msra.mxu0 %v105
    %129 = vmatpush.msra.mxu0 %v104
    %130 = vmatmul.f32.gmra.mxu0 %v112
    %v131 = vpop.f32.mrf.mxu0
    %v132 = vadd.f32 %v109, %v131
    %133 = vdwg.mxu0
    %vm134 = vcmask 31744
    %135 = vst.msk [vmem:[#allocation5] sm:$0xff] %vm134, %v132
    // Predicated region
    $region34: #{dqn_forward.1} parent=1 // pred_check
      _
    $region35: #{dqn_forward.1} parent=1 // pred_check_branch
      %137 = sbr.rel (0) target = $region37
    $region36: #{dqn_forward.1} parent=1 // pred_region
      %139 = vsyncadd [#allocation4], 96
      %s140 = sshll.u32 [#allocation5], 4
      %s141 = int_to_ptr.vmem [resolvable:$true] %s140
      %s142 = sshll.u32 %s7, 4
      %s143 = int_to_ptr.hbm [resolvable:$true] %s142
      %148 = dma.vmem_to_hbm [thread:$0]  %s141, 32, %s143, [#allocation4], 32, 32, 2
    $region37: #{dqn_forward.1} parent=1 // pred_fallthru
      _
    // Predicated region
    $region38: #{dqn_forward.1} parent=1 // pred_check
      _
    $region39: #{dqn_forward.1} parent=1 // pred_check_branch
      %150 = sbr.rel (0) target = $region41
    $region40: #{dqn_forward.1} parent=1 // pred_region
      %152 = dma.done [#allocation4], 128
    $region41: #{dqn_forward.1} parent=1 // pred_fallthru
      _
    %153 = vsyncpa [#allocation3], 1
    %154 = vsyncpa [#allocation4], 1

</llo_original>
